<compile_context>
chip_gen: v7x
topology: tpu7x:2x2x1
jax: 0.10.0
libtpu: 0.0.40
codegen_flags: <defaults>
</compile_context>

<pallas_src>
import math
from functools import partial

import jax
import jax.numpy as jnp
from jax.experimental import pallas as pl
from jax.experimental.pallas import tpu as pltpu


_VMEM_LIMIT = 32 * 1024 * 1024  # safe on v5e/v6e (128 MiB phys) and v7x (64 MiB phys)


# ----------------------------------------------------------------------------
# Kernel A: fused Q/K/V projection, row-tiled, bf16 MXU inputs, f32 accumulate
# ----------------------------------------------------------------------------
def _qkv_proj_kernel(x_ref, w_ref, b_ref, out_ref):
    x = x_ref[...].astype(jnp.bfloat16)                     # (tm, H)  cast in-kernel (VPU)
    acc = jnp.dot(x, w_ref[...], preferred_element_type=jnp.float32)  # (tm, 3H) f32
    out_ref[...] = (acc + b_ref[...]).astype(out_ref.dtype)


def _pick_row_tile(n, target=512):
    """Largest row tile <= target that divides n and keeps (8, *) alignment."""
    if n <= target:
        return n
    for tm in range(target, 7, -1):
        if n % tm == 0 and tm % 8 == 0:
            return tm
    return n  # fallback: whole array in one block


def qkv_projection(x_flat, w_qkv_bf16, b_qkv):
    """x_flat: (N, H) f32; w_qkv_bf16: (H, 3H) bf16; b_qkv: (1, 3H) f32.
    Returns (N, 3H) bf16 = [q | k | v]."""
    N, H = x_flat.shape
    H3 = w_qkv_bf16.shape[1]
    tm = _pick_row_tile(N)
    grid = (N // tm,)
    return pl.pallas_call(
        _qkv_proj_kernel,
        out_shape=jax.ShapeDtypeStruct((N, H3), jnp.bfloat16),
        grid=grid,
        in_specs=[
            pl.BlockSpec((tm, H), lambda i: (i, 0)),       # streamed row tiles
            pl.BlockSpec((H, H3), lambda i: (0, 0)),       # fused weight, resident
            pl.BlockSpec((1, H3), lambda i: (0, 0)),       # fused bias, resident
        ],
        out_specs=pl.BlockSpec((tm, H3), lambda i: (i, 0)),
        compiler_params=pltpu.CompilerParams(
            dimension_semantics=("parallel",),
            vmem_limit_bytes=_VMEM_LIMIT),
    )(x_flat, w_qkv_bf16, b_qkv)


# ----------------------------------------------------------------------------
# Kernel B: per-batch attention over all heads, (B, S, 3H) -> (B, S, H)
# ----------------------------------------------------------------------------
def _attention_kernel(qkv_ref, mask_ref, o_ref, *, num_heads, head_dim, hidden, scale):
    # qkv_ref: (1, S, 3H) bf16; mask_ref: (1, S) f32 additive; o_ref: (1, S, H) f32
    mask = mask_ref[...]                                    # keep 2-D: broadcasts over rows
    # Static Python loop over heads -> all head offsets are static slices
    # (lane-dense (1, S, H) output block written once per batch).
    for h in range(num_heads):
        q0 = h * head_dim
        k0 = hidden + h * head_dim
        v0 = 2 * hidden + h * head_dim
        q = qkv_ref[0, :, q0:q0 + head_dim] * scale         # (S, D) bf16; scale S*D, not S*S
        k = qkv_ref[0, :, k0:k0 + head_dim]                 # (S, D) bf16
        v = qkv_ref[0, :, v0:v0 + head_dim]                 # (S, D) bf16

        # TODO(synk): for S >= ~2k, tile KV flash-style instead of the full (S,S) scores.
        scores = jnp.dot(q, k.T, preferred_element_type=jnp.float32) + mask  # (S, S) f32

        m = jnp.max(scores, axis=-1, keepdims=True)
        p = jnp.exp(scores - m)
        denom = jnp.sum(p, axis=-1, keepdims=True)
        probs = p * pl.reciprocal(denom, approx=True)       # EUP recip, no VPU divide
        # TODO(synk): nn.Dropout(attention_probs_dropout_prob) and head_mask omitted (eval).

        ctx = jnp.dot(probs.astype(v.dtype), v, preferred_element_type=jnp.float32)
        o_ref[0, :, q0:q0 + head_dim] = ctx.astype(o_ref.dtype)


def attention(qkv, mask2d, *, num_heads, head_dim, out_dtype=jnp.float32):
    """qkv: (B, S, 3H) bf16; mask2d: (B, S) f32 additive. Returns (B, S, H) f32."""
    B, S, H3 = qkv.shape
    H = num_heads * head_dim
    kern = partial(_attention_kernel, num_heads=num_heads, head_dim=head_dim,
                   hidden=H, scale=1.0 / math.sqrt(head_dim))
    return pl.pallas_call(
        kern,
        out_shape=jax.ShapeDtypeStruct((B, S, H), out_dtype),
        grid=(B,),
        in_specs=[
            pl.BlockSpec((1, S, H3), lambda b: (b, 0, 0)),  # one qkv DMA per batch
            pl.BlockSpec((1, S), lambda b: (b, 0)),
        ],
        out_specs=pl.BlockSpec((1, S, H), lambda b: (b, 0, 0)),  # lane-dense writeback
        compiler_params=pltpu.CompilerParams(
            dimension_semantics=("parallel",),               # B >= 2 -> shards across v7x TCs
            vmem_limit_bytes=_VMEM_LIMIT),
    )(qkv, mask2d)


# ----------------------------------------------------------------------------
# Module wrapper
# ----------------------------------------------------------------------------
class RobertaSelfAttentionPallas:
    def __init__(self, hidden_size, num_attention_heads, key):
        assert hidden_size % num_attention_heads == 0
        self.num_attention_heads = num_attention_heads
        self.attention_head_size = hidden_size // num_attention_heads
        self.all_head_size = hidden_size

        ks = jax.random.split(key, 6)
        bound = 1.0 / math.sqrt(hidden_size)
        u = lambda k, shape: jax.random.uniform(k, shape, jnp.float32, -bound, bound)
        # PyTorch nn.Linear weight is (out, in); store transposed (in, out) and fuse.
        wq_t = u(ks[0], (hidden_size, hidden_size))
        wk_t = u(ks[1], (hidden_size, hidden_size))
        wv_t = u(ks[2], (hidden_size, hidden_size))
        bq = u(ks[3], (1, hidden_size))
        bk = u(ks[4], (1, hidden_size))
        bv = u(ks[5], (1, hidden_size))
        # Fused (H, 3H) bf16 weight for the MXU; bias stays f32 (added post-accumulation).
        self.w_qkv = jnp.concatenate([wq_t, wk_t, wv_t], axis=1).astype(jnp.bfloat16)
        self.b_qkv = jnp.concatenate([bq, bk, bv], axis=1)

    def __call__(self, hidden_states, attention_mask=None):
        B, S, H = hidden_states.shape
        assert H == self.all_head_size

        x_flat = hidden_states.reshape(B * S, H)
        qkv = qkv_projection(x_flat, self.w_qkv, self.b_qkv)      # (B*S, 3H) bf16
        qkv = qkv.reshape(B, S, 3 * H)                            # free reshape, no transpose

        if attention_mask is None:
            mask2d = jnp.zeros((B, S), jnp.float32)
        else:
            if attention_mask.size != B * S:
                # TODO(synk): (B,1,S,S) causal / per-query masks not supported here.
                raise NotImplementedError("only HF-style (B,1,1,S) additive masks supported")
            mask2d = attention_mask.reshape(B, S).astype(jnp.float32)

        ctx = attention(qkv, mask2d,
                        num_heads=self.num_attention_heads,
                        head_dim=self.attention_head_size)        # (B, S, H) f32
        return (ctx,)


# ----------------------------------------------------------------------------
# Pure-JAX reference (mirrors the kernels' bf16-MXU / f32-accumulate precision)
# ----------------------------------------------------------------------------
def reference(mod, hidden_states, attention_mask):
    B, S, H = hidden_states.shape
    nH, D = mod.num_attention_heads, mod.attention_head_size
    x = hidden_states.astype(jnp.bfloat16)
    qkv = jnp.einsum("bsh,hf->bsf", x, mod.w_qkv,
                     preferred_element_type=jnp.float32) + mod.b_qkv
    qkv = qkv.astype(jnp.bfloat16)
    q, k, v = qkv[..., :H], qkv[..., H:2 * H], qkv[..., 2 * H:]
    t = lambda z: z.reshape(B, S, nH, D).transpose(0, 2, 1, 3)
    q, k, v = t(q), t(k), t(v)
    scores = jnp.einsum("bhqd,bhkd->bhqk", q, k,
                        preferred_element_type=jnp.float32) / math.sqrt(D)
    if attention_mask is not None:
        scores = scores + attention_mask.reshape(B, 1, 1, S)
    probs = jax.nn.softmax(scores, axis=-1)
    ctx = jnp.einsum("bhqk,bhkd->bhqd", probs.astype(jnp.bfloat16), v,
                     preferred_element_type=jnp.float32)
    return ctx.transpose(0, 2, 1, 3).reshape(B, S, H)


if __name__ == "__main__":
    B, S, H, nH = 2, 8, 32, 4

    key = jax.random.PRNGKey(0)
    k_param, k_x, k_mask = jax.random.split(key, 3)

    mod = RobertaSelfAttentionPallas(H, nH, k_param)
    hidden_states = jax.random.normal(k_x, (B, S, H), jnp.float32)

    # Additive attention mask (0 = attend, -10000 = masked), HF-style (B,1,1,S)
    keep = jax.random.bernoulli(k_mask, 0.9, (B, 1, 1, S))
    attention_mask = jnp.where(keep, 0.0, -10000.0).astype(jnp.float32)

    (ctx,) = mod(hidden_states, attention_mask)
    ctx = jax.block_until_ready(ctx)

    ref = reference(mod, hidden_states, attention_mask)
    assert ctx.shape == (B, S, H)
    assert jnp.allclose(ctx, ref, atol=3e-2, rtol=3e-2), "mismatch vs reference"

    print("KERNEL_OK")
</pallas_src>

<mosaic_0001>
module attributes {stable_mosaic.version = 11 : i64} {
  func.func @_qkv_proj_kernel(%arg0: i32, %arg1: memref<16x32xf32, #tpu.memory_space<vmem>>, %arg2: memref<32x96xbf16, #tpu.memory_space<vmem>>, %arg3: memref<1x96xf32, #tpu.memory_space<vmem>>, %arg4: memref<16x96xbf16, #tpu.memory_space<vmem>>) attributes {dimension_semantics = [#tpu.dimension_semantics<parallel>], iteration_bounds = array<i64: 1>, scalar_prefetch = 0 : i64, scratch_operands = 0 : i64, tpu.core_type = #tpu.core_type<tc>, window_params = [{transform_indices = @transform_0, window_bounds = array<i64: 16, 32>}, {pipeline_mode = #tpu.pipeline_mode<synchronous>, transform_indices = @transform_1, window_bounds = array<i64: 32, 96>}, {pipeline_mode = #tpu.pipeline_mode<synchronous>, transform_indices = @transform_2, window_bounds = array<i64: 1, 96>}, {transform_indices = @transform_3, window_bounds = array<i64: 16, 96>}]} {
    %c0 = arith.constant 0 : index
    %c0_0 = arith.constant 0 : index
    %0 = vector.load %arg1[%c0, %c0_0] : memref<16x32xf32, #tpu.memory_space<vmem>>, vector<16x32xf32>
    %1 = arith.truncf %0 : vector<16x32xf32> to vector<16x32xbf16>
    %c0_1 = arith.constant 0 : index
    %c0_2 = arith.constant 0 : index
    %2 = vector.load %arg2[%c0_1, %c0_2] : memref<32x96xbf16, #tpu.memory_space<vmem>>, vector<32x96xbf16>
    %cst = arith.constant dense<0.000000e+00> : vector<16x96xf32>
    %3 = tpu.matmul %1, %2, %cst {dimension_numbers = #tpu.dot_dimension_numbers<[1], [0], [0], [1], [0, 0, 1, 1], [], []>} : vector<16x32xbf16>, vector<32x96xbf16>, vector<16x96xf32> -> vector<16x96xf32>
    %c0_3 = arith.constant 0 : index
    %c0_4 = arith.constant 0 : index
    %4 = vector.load %arg3[%c0_3, %c0_4] : memref<1x96xf32, #tpu.memory_space<vmem>>, vector<1x96xf32>
    %5 = vector.broadcast %4 : vector<1x96xf32> to vector<16x96xf32>
    %6 = arith.addf %3, %5 : vector<16x96xf32>
    %7 = arith.truncf %6 : vector<16x96xf32> to vector<16x96xbf16>
    %c0_5 = arith.constant 0 : index
    %c0_6 = arith.constant 0 : index
    %8 = vector.load %arg4[%c0_5, %c0_6] : memref<16x96xbf16, #tpu.memory_space<vmem>>, vector<16x96xbf16>
    tpu.vector_store %arg4[%c0_5, %c0_6], %7 {strides = array<i32>} : memref<16x96xbf16, #tpu.memory_space<vmem>>, vector<16x96xbf16>,
    return
  }
  func.func @transform_0(%arg0: i32) -> (i32, i32) {
    %c0_i32 = arith.constant 0 : i32
    %c0_i32_0 = arith.constant 0 : i32
    return %arg0, %c0_i32 : i32, i32
  }
  func.func @transform_1(%arg0: i32) -> (i32, i32) {
    %c0_i32 = arith.constant 0 : i32
    %c0_i32_0 = arith.constant 0 : i32
    %c0_i32_1 = arith.constant 0 : i32
    return %c0_i32, %c0_i32_0 : i32, i32
  }
  func.func @transform_2(%arg0: i32) -> (i32, i32) {
    %c0_i32 = arith.constant 0 : i32
    %c0_i32_0 = arith.constant 0 : i32
    %c0_i32_1 = arith.constant 0 : i32
    return %c0_i32, %c0_i32_0 : i32, i32
  }
  func.func @transform_3(%arg0: i32) -> (i32, i32) {
    %c0_i32 = arith.constant 0 : i32
    %c0_i32_0 = arith.constant 0 : i32
    return %arg0, %c0_i32 : i32, i32
  }
}

</mosaic_0001>

<llo_original>
// kernel: tpu_custom_call.1
$region0: #{tpu_custom_call.1}
  #allocation0 [shape = 'u32[]', space=smem, size = 0x4, offset = 0x4, fixed_abs, tag = 'smem constant byte address 0x4 - core index']
  #allocation1 [shape = 'u32[144,128]{1,0:T(1,128)}', space=vmem, size = 0x12000, scoped, tag = 'internal scratch']
  %s0 = inlined_call_operand.hbm [shape: f32[16,32], index: 0, kind: input, shape index: {}]
  %s1 = inlined_call_operand.hbm [shape: bf16[32,96], index: 1, kind: input, shape index: {}]
  %s2 = inlined_call_operand.vmem [shape: f32[1,96], index: 2, kind: input, shape index: {}]
  %s3 = inlined_call_operand.hbm [shape: bf16[16,96], index: 3, kind: output, shape index: {}]
  %s4 = sld [smem:[#allocation0]]
  $region30: #{tpu_custom_call.1} parent=0
    _
  %s6 = ssub.s32 1, %s4
  %s7 = scalar_select 0, %s6, %s4
  $region1: #{tpu_custom_call.1} parent=0
    #allocation2 [shape = 'u8[8192]{0}', space=vmem, size = 0x2000, scoped, tag = 'input window, operand 0, single buffered']
    #allocation3 [shape = 's32[1]{0}', space=sflag, size = 0x4, scoped, tag = 'scoped memory for tpu_custom_call.1']
    #allocation4 [shape = 's32[1]{0}', space=sflag, size = 0x4, scoped, tag = 'scoped memory for tpu_custom_call.1']
    #allocation5 [shape = 'u8[8192]{0}', space=vmem, size = 0x2000, scoped, tag = 'input window, operand 1, single buffered']
    #allocation6 [shape = 's32[1]{0}', space=sflag, size = 0x4, scoped, tag = 'scoped memory for tpu_custom_call.1']
    #allocation7 [shape = 'u8[4096]{0}', space=vmem, size = 0x1000, scoped, tag = 'output window, operand 0, single buffered']
    %8 = vsyncpa [#allocation3], 0
    %9 = vsyncpa [#allocation6], 0
    %10 = vsyncpa [#allocation4], 0
    // Predicated region
    $region2: #{tpu_custom_call.1} parent=1 // pred_check
      _
    $region3: #{tpu_custom_call.1} parent=1 // pred_check_branch
      %12 = sbr.rel (0) target = $region5
    $region4: #{tpu_custom_call.1} parent=1 // pred_region
      %s14 = ssub.s32 256, 256
      %15 = vsyncadd [#allocation3], %s14
      %s16 = sshll.u32 [#allocation2], 4
      %s17 = int_to_ptr.vmem [resolvable:$true] %s16
      %22 = dma.hbm_to_vmem [thread:$0]  %s0, 256, %s17, [#allocation3], 128, 128, 8
    $region5: #{tpu_custom_call.1} parent=1 // pred_fallthru
      _
    // Predicated region
    $region6: #{tpu_custom_call.1} parent=1 // pred_check
      _
    $region7: #{tpu_custom_call.1} parent=1 // pred_check_branch
      %24 = sbr.rel (0) target = $region9
    $region8: #{tpu_custom_call.1} parent=1 // pred_region
      %s26 = ssub.s32 256, 256
      %27 = vsyncadd [#allocation6], %s26
      %s28 = sshll.u32 [#allocation5], 4
      %s29 = int_to_ptr.vmem [resolvable:$true] %s28
      %34 = dma.hbm_to_vmem [thread:$0]  %s1, 256, %s29, [#allocation6], 64, 64, 4
    $region9: #{tpu_custom_call.1} parent=1 // pred_fallthru
      _
    // Predicated region
    $region10: #{tpu_custom_call.1} parent=1 // pred_check
      _
    $region11: #{tpu_custom_call.1} parent=1 // pred_check_branch
      %36 = sbr.rel (0) target = $region13
    $region12: #{tpu_custom_call.1} parent=1 // pred_region
      _
    $region13: #{tpu_custom_call.1} parent=1 // pred_fallthru
      _
    // Predicated region
    $region14: #{tpu_custom_call.1} parent=1 // pred_check
      _
    $region15: #{tpu_custom_call.1} parent=1 // pred_check_branch
      %38 = sbr.rel (0) target = $region17
    $region16: #{tpu_custom_call.1} parent=1 // pred_region
      %39 = dma.done [#allocation3], 256
    $region17: #{tpu_custom_call.1} parent=1 // pred_fallthru
      _
    // Predicated region
    $region18: #{tpu_custom_call.1} parent=1 // pred_check
      _
    $region19: #{tpu_custom_call.1} parent=1 // pred_check_branch
      %41 = sbr.rel (0) target = $region21
    $region20: #{tpu_custom_call.1} parent=1 // pred_region
      %42 = dma.done [#allocation6], 256
    $region21: #{tpu_custom_call.1} parent=1 // pred_fallthru
      _
    %v44 = vld [vmem:[#allocation2] sm:$0xff]
    %v45 = vld [vmem:[#allocation2 + $0x8] sm:$0xff]
    %v46 = vpack.c.bf16 %v45, %v44
    %v47 = vld [vmem:[#allocation5] sm:$0xf]
    %v48 = vld [vmem:[#allocation5 + $0x4] sm:$0xf]
    %v49 = vld [vmem:[#allocation5 + $0x8] sm:$0xf]
    %v50 = vld [vmem:[#allocation5 + $0xc] sm:$0xf]
    %v51 = vld [vmem:[%s2] sm:$0x1]
    %v53 = vlaneseq
    %v54 = vshrl.u32 %v53, 7
    %v55 = vsub.s32 0, %v54
    %v56 = vrot.slane %v51, %v55
    %v62 = vunpack.c.l.b16 %v47
    %v63 = vunpack.c.l.b16 %v48
    %v64 = vunpack.c.l.b16 %v49
    %v65 = vunpack.c.l.b16 %v50
    %v66 = vpack.c.b16 %v63, %v62
    %v67 = vpack.c.b16 %v65, %v64
    %vm70 = vcmask 261120
    %v72 = vsel %vm70, %v46, 0
    %74 = vmatprep.subr.bf16.mxu0 0
    %75 = vmatpush1.bf16.msra.mxu0 %v66
    %76 = vmatprep.subr.bf16.mxu0 0
    %77 = vmatpush1.bf16.msra.mxu0 %v67
    %78 = vmatprep.subr.bf16.mxu0 0
    %79 = vmatpush1.bf16.msra.mxu0 0
    %80 = vmatprep.subr.bf16.mxu0 0
    %81 = vmatpush1.bf16.msra.mxu0 0
    %82 = vmatprep.subr.bf16.mxu0 0
    %83 = vmatpush1.bf16.msra.mxu0 0
    %84 = vmatprep.subr.bf16.mxu0 0
    %85 = vmatpush1.bf16.msra.mxu0 0
    %86 = vmatprep.subr.bf16.mxu0 0
    %87 = vmatpush1.bf16.msra.mxu0 0
    %88 = vmatprep.subr.bf16.mxu0 0
    %89 = vmatpush1.bf16.msra.mxu0 0
    %90 = vmatprep.subr.bf16.mxu0 0
    %91 = vmatpush1.bf16.msra.mxu0 0
    %92 = vmatprep.subr.bf16.mxu0 0
    %93 = vmatpush1.bf16.msra.mxu0 0
    %94 = vmatprep.subr.bf16.mxu0 0
    %95 = vmatpush1.bf16.msra.mxu0 0
    %96 = vmatprep.subr.bf16.mxu0 0
    %97 = vmatpush1.bf16.msra.mxu0 0
    %98 = vmatprep.subr.bf16.mxu0 0
    %99 = vmatpush1.bf16.msra.mxu0 0
    %100 = vmatprep.subr.bf16.mxu0 0
    %101 = vmatpush1.bf16.msra.mxu0 0
    %102 = vmatprep.subr.bf16.mxu0 0
    %103 = vmatpush1.bf16.msra.mxu0 0
    %104 = vmatprep.subr.bf16.mxu0 0
    %105 = vmatpush1.bf16.msra.mxu0 0
    %106 = vmatprep.mubr.bf16.mxu0 0
    %107 = vmatmul.mubr.bf16.gmra.mrb[0].mxu0 %v72
    %v108 = vpop.f32.mrb[0].mxu0
    %v109 = vadd.f32 %v56, %v108
    %v110 = vpop.f32.mrb[0].mxu0
    %v111 = vpop.f32.mrb[0].mxu0
    %v112 = vadd.f32 %v56, %v111
    %v113 = vpop.f32.mrb[0].mxu0
    %114 = vdwg.mxu0
    %v115 = vpack.c.bf16 %v112, %v109
    %v117 = vunpack.c.l.b16 %v115
    %v118 = vunpack.c.h.b16 %v115
    %v119 = vpack.c.b16 %v117, %v117
    %v120 = vpack.c.b16 %v118, %v118
    %vm123 = vcmask 781312
    %124 = vst.msk [vmem:[#allocation7] sm:$0xf] %vm123, %v119
    %125 = vst.msk [vmem:[#allocation7 + $0x4] sm:$0xf] %vm123, %v120
    // Predicated region
    $region22: #{tpu_custom_call.1} parent=1 // pred_check
      _
    $region23: #{tpu_custom_call.1} parent=1 // pred_check_branch
      %127 = sbr.rel (0) target = $region25
    $region24: #{tpu_custom_call.1} parent=1 // pred_region
      %s129 = ssub.s32 128, 128
      %130 = vsyncadd [#allocation4], %s129
      %s131 = sshll.u32 [#allocation7], 4
      %s132 = int_to_ptr.vmem [resolvable:$true] %s131
      %137 = dma.vmem_to_hbm [thread:$0]  %s132, 128, %s3, [#allocation4], 64, 64, 4
    $region25: #{tpu_custom_call.1} parent=1 // pred_fallthru
      _
    // Predicated region
    $region26: #{tpu_custom_call.1} parent=1 // pred_check
      _
    $region27: #{tpu_custom_call.1} parent=1 // pred_check_branch
      %139 = sbr.rel (0) target = $region29
    $region28: #{tpu_custom_call.1} parent=1 // pred_region
      %140 = dma.done [#allocation4], 128
    $region29: #{tpu_custom_call.1} parent=1 // pred_fallthru
      _
    %141 = vsyncpa [#allocation3], 1
    %142 = vsyncpa [#allocation6], 1
    %143 = vsyncpa [#allocation4], 1

</llo_original>
